<compile_context>
chip_gen: v7x
topology: tpu7x:2x2x1
jax: 0.10.0
libtpu: 0.0.40
codegen_flags: <defaults>
</compile_context>

<pallas_src>
import functools

import jax
import jax.numpy as jnp
from jax.experimental import pallas as pl
from jax.experimental.pallas import tpu as pltpu


# -----------------------------------------------------------------------------
# Pallas kernel: fused 4-layer MLP forward for one batch tile, transposed
# orientation (features on sublanes, batch on lanes).
# -----------------------------------------------------------------------------
def mlp_kernel(xt_ref,                    # (2, bm)   input coords, lane-dense
               w1t_ref, b1_ref,           # (32, 2),  (32, 1)   f32
               w2t_ref, b2_ref,           # (32, 32) [f32|bf16], (32, 1) f32
               w3t_ref, b3_ref,           # (32, 32) [f32|bf16], (32, 1) f32
               w4c_ref, b4_ref,           # (32, 1),  (1, 1)    f32
               o_ref,                     # (1, bm)   lane-dense output row
               *, compute_dtype):
    # ---- layer 1 (in=2): VPU only — two broadcast FMAs instead of a K=2
    #      matmul that would waste >98% of the systolic array.
    x0 = xt_ref[0:1, :]                                   # (1, bm)
    x1 = xt_ref[1:2, :]                                   # (1, bm)
    h = jnp.tanh(w1t_ref[:, 0:1] * x0
                 + w1t_ref[:, 1:2] * x1
                 + b1_ref[...])                           # (32, bm) f32

    # ---- layers 2-3: 32x32 MXU matmuls, f32 accumulation.
    # On v6e/v7x the wrapper passes bf16 weights and compute_dtype=bf16:
    # ~2x EUP tanh / VPU throughput and half the activation vreg traffic.
    # On v5e (no bf16 VPU/EUP) compute_dtype stays f32 and the casts are no-ops.
    h = h.astype(compute_dtype)
    z2 = jnp.dot(w2t_ref[...], h,
                 preferred_element_type=jnp.float32) + b2_ref[...]
    h = jnp.tanh(z2.astype(compute_dtype))                # (32, bm)
    z3 = jnp.dot(w3t_ref[...], h,
                 preferred_element_type=jnp.float32) + b3_ref[...]
    h = jnp.tanh(z3.astype(compute_dtype))                # (32, bm)

    # ---- layer 4 (out=1): VPU multiply + sublane reduce -> lane-dense row,
    #      avoiding an N=1 matmul and masked 1-lane output stores.
    out_row = (jnp.sum(h.astype(jnp.float32) * w4c_ref[...],
                       axis=0, keepdims=True)
               + b4_ref[...])                             # (1, bm)

    o_ref[...] = out_row.astype(o_ref.dtype)


def _const_spec(shape):
    # whole-array block, same tile for every grid step (kept resident in VMEM)
    return pl.BlockSpec(shape, lambda i: (0,) * len(shape))


def _auto_block_m(n, *, max_bm=4096, min_bm=512):
    """Large tile to amortize the ~0.35us grid-step overhead, but clamped so
    the parallel batch axis keeps >= 2 grid steps (both v7x TensorCores busy)
    whenever the batch is big enough."""
    if n <= min_bm:
        return min_bm
    half = -(-n // 2)                       # ceil(n/2)
    bm = (half // min_bm) * min_bm          # biggest multiple of 512 <= n/2
    if bm == 0:
        bm = min_bm
    return max(min_bm, min(max_bm, bm))


@functools.partial(jax.jit, static_argnames=("block_m", "use_bf16"))
def sequential_model_forward_t(xt, params, *, block_m, use_bf16=False):
    """Pallas forward pass of sequential_model, transposed entry point.

    xt:      (2, N) float32 collocation coords, already lane-dense (no
             relayout needed — preferred inside a training loop).
    params:  list of (W, b) with W of shape (in, out) (transpose of torch's
             (out, in)), b of shape (1, out).
    returns: (N, 1) float32  u(x, theta)
    """
    d_in, n = xt.shape
    (w1, b1), (w2, b2), (w3, b3), (w4, b4) = params
    h1, h2, h3 = w1.shape[1], w2.shape[1], w3.shape[1]
    d_out = w4.shape[1]
    assert d_in == 2 and d_out == 1

    n_blocks = pl.cdiv(n, block_m)
    n_pad = n_blocks * block_m

    # pad batch (lane axis) to a multiple of block_m
    xt = jnp.pad(xt.astype(jnp.float32), ((0, 0), (0, n_pad - n)))

    compute_dtype = jnp.bfloat16 if use_bf16 else jnp.float32

    # transposed / column-form weights for the feature-on-sublane orientation
    w1t = w1.T.astype(jnp.float32)            # (h1, 2)
    w2t = w2.T.astype(compute_dtype)          # (h2, h1)
    w3t = w3.T.astype(compute_dtype)          # (h3, h2)
    w4c = w4.reshape(h3, 1).astype(jnp.float32)
    b1c = b1.reshape(h1, 1).astype(jnp.float32)
    b2c = b2.reshape(h2, 1).astype(jnp.float32)
    b3c = b3.reshape(h3, 1).astype(jnp.float32)
    b4c = b4.reshape(1, 1).astype(jnp.float32)

    in_specs = [
        pl.BlockSpec((d_in, block_m), lambda i: (0, i)),   # x tile (lane-dense)
        _const_spec(w1t.shape), _const_spec(b1c.shape),
        _const_spec(w2t.shape), _const_spec(b2c.shape),
        _const_spec(w3t.shape), _const_spec(b3c.shape),
        _const_spec(w4c.shape), _const_spec(b4c.shape),
    ]
    # 2-D lane-dense output: one (1, block_m) row per grid step; sublane block
    # dim (1) equals the full array dim, so the (8,128) rule is satisfied and
    # the store stays an unmasked full-lane vst.
    out_specs = pl.BlockSpec((1, block_m), lambda i: (0, i))

    # advisory cost hint for XLA's scheduler around the custom call
    flops = 2 * n_pad * (d_in * h1 + h1 * h2 + h2 * h3 + h3 * d_out)
    transcendentals = n_pad * (h1 + h2 + h3)
    weight_bytes = 4 * (d_in * h1 + h1 * h2 + h2 * h3 + h3 * d_out
                        + h1 + h2 + h3 + d_out)
    bytes_accessed = 4 * n_pad * (d_in + d_out) + weight_bytes

    out = pl.pallas_call(
        functools.partial(mlp_kernel, compute_dtype=compute_dtype),
        out_shape=jax.ShapeDtypeStruct((1, n_pad), jnp.float32),
        grid_spec=pltpu.PrefetchScalarGridSpec(
            num_scalar_prefetch=0,
            grid=(n_blocks,),
            in_specs=in_specs,
            out_specs=out_specs,
        ),
        compiler_params=pltpu.CompilerParams(
            dimension_semantics=("parallel",)),
        cost_estimate=pl.CostEstimate(
            flops=flops,
            transcendentals=transcendentals,
            bytes_accessed=bytes_accessed),
    )(xt, w1t, b1c, w2t, b2c, w3t, b3c, w4c, b4c)

    # (1, n_pad) lane j of block i -> batch index i*block_m + j; pure bitcast
    return out.reshape(n_pad, 1)[:n]


def sequential_model_forward(x, params, *, block_m=None, use_bf16=False):
    """Convenience wrapper matching the torch module's (N, 2) input layout.

    NOTE: this does one (N,2)->(2,N) HBM relayout. Inside a PINN training
    loop, produce the collocation points as (2, N) and call
    sequential_model_forward_t directly to skip that pass.
    """
    n = int(x.shape[0])
    if block_m is None:
        block_m = _auto_block_m(n)
    return sequential_model_forward_t(jnp.transpose(x), params,
                                      block_m=block_m, use_bf16=use_bf16)


# -----------------------------------------------------------------------------
# Deterministic parameter construction (mirrors nn.Linear + xavier_normal_)
# -----------------------------------------------------------------------------
def init_params(layers, key):
    params = []
    for i in range(len(layers) - 1):
        fan_in, fan_out = layers[i], layers[i + 1]
        key, sub = jax.random.split(key)
        std = (2.0 / (fan_in + fan_out)) ** 0.5          # xavier normal, gain=1
        # torch weight is (out, in); store the transpose (in, out)
        w = std * jax.random.normal(sub, (fan_in, fan_out), dtype=jnp.float32)
        b = jnp.zeros((1, fan_out), dtype=jnp.float32)   # nn.init.zeros_
        params.append((w, b))
    return params


def reference_forward(x, params):
    # pure-JAX reference of sequential_model.forward for validation
    h = x
    for (w, b) in params[:-1]:
        h = jnp.tanh(jnp.dot(h, w, precision="highest") + b)
    w, b = params[-1]
    return jnp.dot(h, w, precision="highest") + b


if __name__ == "__main__":
    # layers = [2, 32, 32, 32, 1]  (input [x, y] -> u(x, theta))
    layers = [2, 32, 32, 32, 1]
    key = jax.random.PRNGKey(0)
    kp, kx = jax.random.split(key)

    params = init_params(layers, kp)

    # deterministic batch of collocation points; intentionally NOT a multiple
    # of block_m to exercise the padding path, and big enough that the
    # auto-chosen tile keeps >= 2 grid steps for v7x megacore sharding.
    n = 1800
    x = jax.random.uniform(kx, (n, layers[0]), dtype=jnp.float32,
                           minval=-1.0, maxval=1.0)

    ref = reference_forward(x, params)

    # default path: auto block_m (512 here -> 4 parallel grid steps), f32
    out = jax.block_until_ready(sequential_model_forward(x, params))
    assert out.shape == (n, layers[-1])
    assert jnp.allclose(out, ref, atol=1e-4, rtol=1e-4), "mismatch vs reference"

    # explicit larger tile (overhead-amortized config for big batches)
    out_big = jax.block_until_ready(
        sequential_model_forward(x, params, block_m=2048))
    assert jnp.allclose(out_big, ref, atol=1e-4, rtol=1e-4), "block_m=2048 mismatch"

    # optional bf16 layers-2/3 path: only exercised on v6e/v7x (bf16 VPU/EUP);
    # v5e stays on the f32 path. Looser tolerance by design — validate PDE
    # residual accuracy end-to-end before adopting in training.
    device_kind = jax.devices()[0].device_kind.lower()
    if ("v6" in device_kind) or ("v7" in device_kind):
        out_bf16 = jax.block_until_ready(
            sequential_model_forward(x, params, use_bf16=True))
        assert jnp.allclose(out_bf16, ref, atol=5e-2, rtol=5e-2), "bf16 mismatch"

    # TODO(synk): .function() PDE residual (u_xx, u_yy), losses and the Adam
    # training loop need nested autograd — computed via jax.grad on this
    # wrapper, not inside the Pallas kernel; only forward() is kernelized.
    print("KERNEL_OK")
</pallas_src>

<mosaic_0001>
module attributes {stable_mosaic.version = 11 : i64} {
  func.func @mlp_kernel(%arg0: i32, %arg1: memref<2x512xf32, #tpu.memory_space<vmem>>, %arg2: memref<32x2xf32, #tpu.memory_space<vmem>>, %arg3: memref<32x1xf32, #tpu.memory_space<vmem>>, %arg4: memref<32x32xf32, #tpu.memory_space<vmem>>, %arg5: memref<32x1xf32, #tpu.memory_space<vmem>>, %arg6: memref<32x32xf32, #tpu.memory_space<vmem>>, %arg7: memref<32x1xf32, #tpu.memory_space<vmem>>, %arg8: memref<32x1xf32, #tpu.memory_space<vmem>>, %arg9: memref<1x1xf32, #tpu.memory_space<vmem>>, %arg10: memref<1x512xf32, #tpu.memory_space<vmem>>) attributes {dimension_semantics = [#tpu.dimension_semantics<parallel>], iteration_bounds = array<i64: 4>, scalar_prefetch = 0 : i64, scratch_operands = 0 : i64, tpu.core_type = #tpu.core_type<tc>, window_params = [{transform_indices = @transform_0, window_bounds = array<i64: 2, 512>}, {pipeline_mode = #tpu.pipeline_mode<synchronous>, transform_indices = @transform_1, window_bounds = array<i64: 32, 2>}, {pipeline_mode = #tpu.pipeline_mode<synchronous>, transform_indices = @transform_2, window_bounds = array<i64: 32, 1>}, {pipeline_mode = #tpu.pipeline_mode<synchronous>, transform_indices = @transform_3, window_bounds = array<i64: 32, 32>}, {pipeline_mode = #tpu.pipeline_mode<synchronous>, transform_indices = @transform_4, window_bounds = array<i64: 32, 1>}, {pipeline_mode = #tpu.pipeline_mode<synchronous>, transform_indices = @transform_5, window_bounds = array<i64: 32, 32>}, {pipeline_mode = #tpu.pipeline_mode<synchronous>, transform_indices = @transform_6, window_bounds = array<i64: 32, 1>}, {pipeline_mode = #tpu.pipeline_mode<synchronous>, transform_indices = @transform_7, window_bounds = array<i64: 32, 1>}, {pipeline_mode = #tpu.pipeline_mode<synchronous>, transform_indices = @transform_8, window_bounds = array<i64: 1, 1>}, {transform_indices = @transform_9, window_bounds = array<i64: 1, 512>}]} {
    %c0 = arith.constant 0 : index
    %c0_0 = arith.constant 0 : index
    %0 = vector.load %arg1[%c0, %c0_0] : memref<2x512xf32, #tpu.memory_space<vmem>>, vector<1x512xf32>
    %c1 = arith.constant 1 : index
    %c0_1 = arith.constant 0 : index
    %1 = vector.load %arg1[%c1, %c0_1] : memref<2x512xf32, #tpu.memory_space<vmem>>, vector<1x512xf32>
    %c0_2 = arith.constant 0 : index
    %c0_3 = arith.constant 0 : index
    %2 = vector.load %arg2[%c0_2, %c0_3] : memref<32x2xf32, #tpu.memory_space<vmem>>, vector<32x1xf32>
    %3 = vector.broadcast %2 : vector<32x1xf32> to vector<32x512xf32>
    %4 = vector.broadcast %0 : vector<1x512xf32> to vector<32x512xf32>
    %5 = arith.mulf %3, %4 : vector<32x512xf32>
    %c0_4 = arith.constant 0 : index
    %c1_5 = arith.constant 1 : index
    %6 = vector.load %arg2[%c0_4, %c1_5] : memref<32x2xf32, #tpu.memory_space<vmem>>, vector<32x1xf32>
    %7 = vector.broadcast %6 : vector<32x1xf32> to vector<32x512xf32>
    %8 = vector.broadcast %1 : vector<1x512xf32> to vector<32x512xf32>
    %9 = arith.mulf %7, %8 : vector<32x512xf32>
    %10 = arith.addf %5, %9 : vector<32x512xf32>
    %c0_6 = arith.constant 0 : index
    %c0_7 = arith.constant 0 : index
    %11 = vector.load %arg3[%c0_6, %c0_7] : memref<32x1xf32, #tpu.memory_space<vmem>>, vector<32x1xf32>
    %12 = vector.broadcast %11 : vector<32x1xf32> to vector<32x512xf32>
    %13 = arith.addf %10, %12 : vector<32x512xf32>
    %14 = math.tanh %13 : vector<32x512xf32>
    %c0_8 = arith.constant 0 : index
    %c0_9 = arith.constant 0 : index
    %15 = vector.load %arg4[%c0_8, %c0_9] : memref<32x32xf32, #tpu.memory_space<vmem>>, vector<32x32xf32>
    %cst = arith.constant dense<0.000000e+00> : vector<32x512xf32>
    %16 = tpu.matmul %15, %14, %cst {dimension_numbers = #tpu.dot_dimension_numbers<[1], [0], [0], [1], [0, 0, 1, 1], [], []>} : vector<32x32xf32>, vector<32x512xf32>, vector<32x512xf32> -> vector<32x512xf32>
    %c0_10 = arith.constant 0 : index
    %c0_11 = arith.constant 0 : index
    %17 = vector.load %arg5[%c0_10, %c0_11] : memref<32x1xf32, #tpu.memory_space<vmem>>, vector<32x1xf32>
    %18 = vector.broadcast %17 : vector<32x1xf32> to vector<32x512xf32>
    %19 = arith.addf %16, %18 : vector<32x512xf32>
    %20 = math.tanh %19 : vector<32x512xf32>
    %c0_12 = arith.constant 0 : index
    %c0_13 = arith.constant 0 : index
    %21 = vector.load %arg6[%c0_12, %c0_13] : memref<32x32xf32, #tpu.memory_space<vmem>>, vector<32x32xf32>
    %cst_14 = arith.constant dense<0.000000e+00> : vector<32x512xf32>
    %22 = tpu.matmul %21, %20, %cst_14 {dimension_numbers = #tpu.dot_dimension_numbers<[1], [0], [0], [1], [0, 0, 1, 1], [], []>} : vector<32x32xf32>, vector<32x512xf32>, vector<32x512xf32> -> vector<32x512xf32>
    %c0_15 = arith.constant 0 : index
    %c0_16 = arith.constant 0 : index
    %23 = vector.load %arg7[%c0_15, %c0_16] : memref<32x1xf32, #tpu.memory_space<vmem>>, vector<32x1xf32>
    %24 = vector.broadcast %23 : vector<32x1xf32> to vector<32x512xf32>
    %25 = arith.addf %22, %24 : vector<32x512xf32>
    %26 = math.tanh %25 : vector<32x512xf32>
    %c0_17 = arith.constant 0 : index
    %c0_18 = arith.constant 0 : index
    %27 = vector.load %arg8[%c0_17, %c0_18] : memref<32x1xf32, #tpu.memory_space<vmem>>, vector<32x1xf32>
    %28 = vector.broadcast %27 : vector<32x1xf32> to vector<32x512xf32>
    %29 = arith.mulf %26, %28 : vector<32x512xf32>
    %cst_19 = arith.constant dense<0.000000e+00> : vector<512xf32>
    %30 = vector.multi_reduction <add>, %29, %cst_19 [0] : vector<32x512xf32> to vector<512xf32>
    %31 = vector.shape_cast %30 : vector<512xf32> to vector<1x512xf32>
    %c0_20 = arith.constant 0 : index
    %c0_21 = arith.constant 0 : index
    %32 = vector.load %arg9[%c0_20, %c0_21] : memref<1x1xf32, #tpu.memory_space<vmem>>, vector<1x1xf32>
    %33 = vector.broadcast %32 : vector<1x1xf32> to vector<1x512xf32>
    %34 = arith.addf %31, %33 : vector<1x512xf32>
    %c0_22 = arith.constant 0 : index
    %c0_23 = arith.constant 0 : index
    %35 = vector.load %arg10[%c0_22, %c0_23] : memref<1x512xf32, #tpu.memory_space<vmem>>, vector<1x512xf32>
    tpu.vector_store %arg10[%c0_22, %c0_23], %34 {strides = array<i32>} : memref<1x512xf32, #tpu.memory_space<vmem>>, vector<1x512xf32>,
    return
  }
  func.func @transform_0(%arg0: i32) -> (i32, i32) {
    %c0_i32 = arith.constant 0 : i32
    %c0_i32_0 = arith.constant 0 : i32
    return %c0_i32, %arg0 : i32, i32
  }
  func.func @transform_1(%arg0: i32) -> (i32, i32) {
    %c0_i32 = arith.constant 0 : i32
    %c0_i32_0 = arith.constant 0 : i32
    %c0_i32_1 = arith.constant 0 : i32
    return %c0_i32, %c0_i32_0 : i32, i32
  }
  func.func @transform_2(%arg0: i32) -> (i32, i32) {
    %c0_i32 = arith.constant 0 : i32
    %c0_i32_0 = arith.constant 0 : i32
    %c0_i32_1 = arith.constant 0 : i32
    return %c0_i32, %c0_i32_0 : i32, i32
  }
  func.func @transform_3(%arg0: i32) -> (i32, i32) {
    %c0_i32 = arith.constant 0 : i32
    %c0_i32_0 = arith.constant 0 : i32
    %c0_i32_1 = arith.constant 0 : i32
    return %c0_i32, %c0_i32_0 : i32, i32
  }
  func.func @transform_4(%arg0: i32) -> (i32, i32) {
    %c0_i32 = arith.constant 0 : i32
    %c0_i32_0 = arith.constant 0 : i32
    %c0_i32_1 = arith.constant 0 : i32
    return %c0_i32, %c0_i32_0 : i32, i32
  }
  func.func @transform_5(%arg0: i32) -> (i32, i32) {
    %c0_i32 = arith.constant 0 : i32
    %c0_i32_0 = arith.constant 0 : i32
    %c0_i32_1 = arith.constant 0 : i32
    return %c0_i32, %c0_i32_0 : i32, i32
  }
  func.func @transform_6(%arg0: i32) -> (i32, i32) {
    %c0_i32 = arith.constant 0 : i32
    %c0_i32_0 = arith.constant 0 : i32
    %c0_i32_1 = arith.constant 0 : i32
    return %c0_i32, %c0_i32_0 : i32, i32
  }
  func.func @transform_7(%arg0: i32) -> (i32, i32) {
    %c0_i32 = arith.constant 0 : i32
    %c0_i32_0 = arith.constant 0 : i32
    %c0_i32_1 = arith.constant 0 : i32
    return %c0_i32, %c0_i32_0 : i32, i32
  }
  func.func @transform_8(%arg0: i32) -> (i32, i32) {
    %c0_i32 = arith.constant 0 : i32
    %c0_i32_0 = arith.constant 0 : i32
    %c0_i32_1 = arith.constant 0 : i32
    return %c0_i32, %c0_i32_0 : i32, i32
  }
  func.func @transform_9(%arg0: i32) -> (i32, i32) {
    %c0_i32 = arith.constant 0 : i32
    %c0_i32_0 = arith.constant 0 : i32
    return %c0_i32, %arg0 : i32, i32
  }
}

</mosaic_0001>

<llo_original>
// kernel: sequential_model_forward_t.1
$region0: #{sequential_model_forward_t.1}
  #allocation0 [shape = 'u32[]', space=smem, size = 0x4, offset = 0x4, fixed_abs, tag = 'smem constant byte address 0x4 - core index']
  #allocation1 [shape = 'u32[144,128]{1,0:T(1,128)}', space=vmem, size = 0x12000, scoped, tag = 'internal scratch']
  #allocation2 [shape = 'f32[1,1]{1,0:T(1,128)S(1)}', space=vmem, size = 0x200, scoped, tag = 'scoped memory for sequential_model_forward_t.1']
  %s0 = inlined_call_operand.vmem [shape: f32[2,2048], index: 0, kind: input, shape index: {}]
  %s1 = inlined_call_operand.vmem [shape: f32[32,2], index: 1, kind: input, shape index: {}]
  %s2 = inlined_call_operand.vmem [shape: f32[32,1], index: 2, kind: input, shape index: {}]
  %s3 = inlined_call_operand.vmem [shape: f32[32,32], index: 3, kind: input, shape index: {}]
  %s4 = inlined_call_operand.vmem [shape: f32[32,1], index: 4, kind: input, shape index: {}]
  %s5 = inlined_call_operand.vmem [shape: f32[32,32], index: 5, kind: input, shape index: {}]
  %s6 = inlined_call_operand.vmem [shape: f32[32,1], index: 6, kind: input, shape index: {}]
  %s7 = inlined_call_operand.vmem [shape: f32[32,1], index: 7, kind: input, shape index: {}]
  %s8 = inlined_call_operand.<no memory space> [shape: f32[1,1], index: 8, kind: input, shape index: {}]
  %s9 = inlined_call_operand.vmem [shape: f32[1,2048], index: 9, kind: output, shape index: {}]
  %s10 = sld [smem:[#allocation0]]
  $region69: #{sequential_model_forward_t.1} parent=0
    _
  %s12 = ssub.s32 1, %s10
  %s13 = scalar_select 0, %s12, %s10
  %v14 = vstv %s8
  %15 = vst [vmem:[#allocation2] sm:$0x1] %v14
  loop: start=0, step=1, limit=6
  $region2: #{sequential_model_forward_t.1} parent=0 // loop_pre_header
    _
  $region3: #{sequential_model_forward_t.1} parent=0 // loop_header
    %s17 = sphi 0, %s21
    %p18 = scmp.ge.s32.totalorder %s17, 6
    %s27 = sphi 0, %s29
    %s30 = sphi 0, %s27
    %s31 = sphi 0, %s30
    %s47 = sphi 0, %s31
    %s51 = sphi 0, %s51
    %s53 = sphi 0, %s51
    %s54 = sphi 0, %s53
    %s68 = sphi 0, %s54
    %s72 = sphi 0, %s72
    %s74 = sphi 0, %s72
    %s75 = sphi 0, %s74
    %s89 = sphi 0, %s75
    %s93 = sphi 0, %s93
    %s95 = sphi 0, %s93
    %s96 = sphi 0, %s95
    %s110 = sphi 0, %s96
    %s114 = sphi 0, %s114
    %s116 = sphi 0, %s114
    %s117 = sphi 0, %s116
    %s131 = sphi 0, %s117
    %s135 = sphi 0, %s135
    %s137 = sphi 0, %s135
    %s138 = sphi 0, %s137
    %s152 = sphi 0, %s138
    %s156 = sphi 0, %s156
    %s158 = sphi 0, %s156
    %s159 = sphi 0, %s158
    %s173 = sphi 0, %s159
    %s177 = sphi 0, %s177
    %s179 = sphi 0, %s177
    %s180 = sphi 0, %s179
    %s194 = sphi 0, %s180
    %s198 = sphi 0, %s198
    %s200 = sphi 0, %s198
    %s201 = sphi 0, %s200
    %s215 = sphi 0, %s201
    %s221 = sphi 0, %s223
    %s224 = sphi 0, %s221
    %s225 = sphi 0, %s224
    %s241 = sphi 0, %s225
  $region4: #{sequential_model_forward_t.1} parent=0 // loop_header_branch
    %20 = sbr.rel (%p18) target = $region8
  $region5: #{sequential_model_forward_t.1} parent=0 // loop_body
    %s22 = ssub.s32 %s17, 1
    %s23 = ssub.s32 %s17, 2
    %s24 = sadd.s32 %s17, 1
    %s25 = ssub.s32 %s17, %s24
    %p26 = scmp.eq.s32.totalorder %s25, 0
    %s28 = sadd.s32 %s27, 1
    %s29 = scalar_select %p26, %s27, %s28
    %p32 = pneg %p26
    %p33 = scmp.eq.s32.totalorder %s17, 3
    %p34 = por %p32, %p33
    %p35 = scmp.ne.s32.totalorder %s27, %s30
    %p36 = scmp.eq.s32.totalorder %s17, 0
    %p37 = por %p35, %p36
    %p38 = scmp.ne.s32.totalorder %s27, %s30
    %p39 = scmp.eq.s32.totalorder %s22, 3
    %p40 = por %p38, %p39
    %p41 = scmp.ne.s32.totalorder %s30, %s31
    %p42 = scmp.eq.s32.totalorder %s22, 0
    %p43 = por %p41, %p42
    %p44 = scmp.ne.s32.totalorder %s30, %s31
    %p45 = scmp.eq.s32.totalorder %s23, 3
    %p46 = por %p44, %p45
    %p48 = scmp.ne.s32.totalorder %s31, %s47
    %p49 = scmp.eq.s32.totalorder %s23, 0
    %p50 = por %p48, %p49
    %s52 = sadd.s32 %s51, 1
    %p55 = scmp.eq.s32.totalorder %s17, 3
    %p56 = scmp.ne.s32.totalorder %s51, %s53
    %p57 = scmp.eq.s32.totalorder %s17, 0
    %p58 = por %p56, %p57
    %p59 = scmp.ne.s32.totalorder %s51, %s53
    %p60 = scmp.eq.s32.totalorder %s22, 3
    %p61 = por %p59, %p60
    %p62 = scmp.ne.s32.totalorder %s53, %s54
    %p63 = scmp.eq.s32.totalorder %s22, 0
    %p64 = por %p62, %p63
    %p65 = scmp.ne.s32.totalorder %s53, %s54
    %p66 = scmp.eq.s32.totalorder %s23, 3
    %p67 = por %p65, %p66
    %p69 = scmp.ne.s32.totalorder %s54, %s68
    %p70 = scmp.eq.s32.totalorder %s23, 0
    %p71 = por %p69, %p70
    %s73 = sadd.s32 %s72, 1
    %p76 = scmp.eq.s32.totalorder %s17, 3
    %p77 = scmp.ne.s32.totalorder %s72, %s74
    %p78 = scmp.eq.s32.totalorder %s17, 0
    %p79 = por %p77, %p78
    %p80 = scmp.ne.s32.totalorder %s72, %s74
    %p81 = scmp.eq.s32.totalorder %s22, 3
    %p82 = por %p80, %p81
    %p83 = scmp.ne.s32.totalorder %s74, %s75
    %p84 = scmp.eq.s32.totalorder %s22, 0
    %p85 = por %p83, %p84
    %p86 = scmp.ne.s32.totalorder %s74, %s75
    %p87 = scmp.eq.s32.totalorder %s23, 3
    %p88 = por %p86, %p87
    %p90 = scmp.ne.s32.totalorder %s75, %s89
    %p91 = scmp.eq.s32.totalorder %s23, 0
    %p92 = por %p90, %p91
    %s94 = sadd.s32 %s93, 1
    %p97 = scmp.eq.s32.totalorder %s17, 3
    %p98 = scmp.ne.s32.totalorder %s93, %s95
    %p99 = scmp.eq.s32.totalorder %s17, 0
    %p100 = por %p98, %p99
    %p101 = scmp.ne.s32.totalorder %s93, %s95
    %p102 = scmp.eq.s32.totalorder %s22, 3
    %p103 = por %p101, %p102
    %p104 = scmp.ne.s32.totalorder %s95, %s96
    %p105 = scmp.eq.s32.totalorder %s22, 0
    %p106 = por %p104, %p105
    %p107 = scmp.ne.s32.totalorder %s95, %s96
    %p108 = scmp.eq.s32.totalorder %s23, 3
    %p109 = por %p107, %p108
    %p111 = scmp.ne.s32.totalorder %s96, %s110
    %p112 = scmp.eq.s32.totalorder %s23, 0
    %p113 = por %p111, %p112
    %s115 = sadd.s32 %s114, 1
    %p118 = scmp.eq.s32.totalorder %s17, 3
    %p119 = scmp.ne.s32.totalorder %s114, %s116
    %p120 = scmp.eq.s32.totalorder %s17, 0
    %p121 = por %p119, %p120
    %p122 = scmp.ne.s32.totalorder %s114, %s116
    %p123 = scmp.eq.s32.totalorder %s22, 3
    %p124 = por %p122, %p123
    %p125 = scmp.ne.s32.totalorder %s116, %s117
    %p126 = scmp.eq.s32.totalorder %s22, 0
    %p127 = por %p125, %p126
    %p128 = scmp.ne.s32.totalorder %s116, %s117
    %p129 = scmp.eq.s32.totalorder %s23, 3
    %p130 = por %p128, %p129
    %p132 = scmp.ne.s32.totalorder %s117, %s131
    %p133 = scmp.eq.s32.totalorder %s23, 0
    %p134 = por %p132, %p133
    %s136 = sadd.s32 %s135, 1
    %p139 = scmp.eq.s32.totalorder %s17, 3
    %p140 = scmp.ne.s32.totalorder %s135, %s137
    %p141 = scmp.eq.s32.totalorder %s17, 0
    %p142 = por %p140, %p141
    %p143 = scmp.ne.s32.totalorder %s135, %s137
    %p144 = scmp.eq.s32.totalorder %s22, 3
    %p145 = por %p143, %p144
    %p146 = scmp.ne.s32.totalorder %s137, %s138
    %p147 = scmp.eq.s32.totalorder %s22, 0
    %p148 = por %p146, %p147
    %p149 = scmp.ne.s32.totalorder %s137, %s138
    %p150 = scmp.eq.s32.totalorder %s23, 3
    %p151 = por %p149, %p150
    %p153 = scmp.ne.s32.totalorder %s138, %s152
    %p154 = scmp.eq.s32.totalorder %s23, 0
    %p155 = por %p153, %p154
    %s157 = sadd.s32 %s156, 1
    %p160 = scmp.eq.s32.totalorder %s17, 3
    %p161 = scmp.ne.s32.totalorder %s156, %s158
    %p162 = scmp.eq.s32.totalorder %s17, 0
    %p163 = por %p161, %p162
    %p164 = scmp.ne.s32.totalorder %s156, %s158
    %p165 = scmp.eq.s32.totalorder %s22, 3
    %p166 = por %p164, %p165
    %p167 = scmp.ne.s32.totalorder %s158, %s159
    %p168 = scmp.eq.s32.totalorder %s22, 0
    %p169 = por %p167, %p168
    %p170 = scmp.ne.s32.totalorder %s158, %s159
    %p171 = scmp.eq.s32.totalorder %s23, 3
    %p172 = por %p170, %p171
    %p174 = scmp.ne.s32.totalorder %s159, %s173
    %p175 = scmp.eq.s32.totalorder %s23, 0
    %p176 = por %p174, %p175
    %s178 = sadd.s32 %s177, 1
    %p181 = scmp.eq.s32.totalorder %s17, 3
    %p182 = scmp.ne.s32.totalorder %s177, %s179
    %p183 = scmp.eq.s32.totalorder %s17, 0
    %p184 = por %p182, %p183
    %p185 = scmp.ne.s32.totalorder %s177, %s179
    %p186 = scmp.eq.s32.totalorder %s22, 3
    %p187 = por %p185, %p186
    %p188 = scmp.ne.s32.totalorder %s179, %s180
    %p189 = scmp.eq.s32.totalorder %s22, 0
    %p190 = por %p188, %p189
    %p191 = scmp.ne.s32.totalorder %s179, %s180
    %p192 = scmp.eq.s32.totalorder %s23, 3
    %p193 = por %p191, %p192
    %p195 = scmp.ne.s32.totalorder %s180, %s194
    %p196 = scmp.eq.s32.totalorder %s23, 0
    %p197 = por %p195, %p196
    %s199 = sadd.s32 %s198, 1
    %p202 = scmp.eq.s32.totalorder %s17, 3
    %p203 = scmp.ne.s32.totalorder %s198, %s200
    %p204 = scmp.eq.s32.totalorder %s17, 0
    %p205 = por %p203, %p204
    %p206 = scmp.ne.s32.totalorder %s198, %s200
    %p207 = scmp.eq.s32.totalorder %s22, 3
    %p208 = por %p206, %p207
    %p209 = scmp.ne.s32.totalorder %s200, %s201
    %p210 = scmp.eq.s32.totalorder %s22, 0
    %p211 = por %p209, %p210
    %p212 = scmp.ne.s32.totalorder %s200, %s201
    %p213 = scmp.eq.s32.totalorder %s23, 3
    %p214 = por %p212, %p213
    %p216 = scmp.ne.s32.totalorder %s201, %s215
    %p217 = scmp.eq.s32.totalorder %s23, 0
    %p218 = por %p216, %p217
    %s219 = ssub.s32 %s17, %s24
    %p220 = scmp.eq.s32.totalorder %s219, 0
    %s222 = sadd.s32 %s221, 1
    %s223 = scalar_select %p220, %s221, %s222
    %p226 = pneg %p220
    %p227 = scmp.eq.s32.totalorder %s17, 3
    %p228 = por %p226, %p227
    %p229 = scmp.ne.s32.totalorder %s221, %s224
    %p230 = scmp.eq.s32.totalorder %s17, 0
    %p231 = por %p229, %p230
    %p232 = scmp.ne.s32.totalorder %s221, %s224
    %p233 = scmp.eq.s32.totalorder %s22, 3
    %p234 = por %p232, %p233
    %p235 = scmp.ne.s32.totalorder %s224, %s225
    %p236 = scmp.eq.s32.totalorder %s22, 0
    %p237 = por %p235, %p236
    %p238 = scmp.ne.s32.totalorder %s224, %s225
    %p239 = scmp.eq.s32.totalorder %s23, 3
    %p240 = por %p238, %p239
    %p242 = scmp.ne.s32.totalorder %s225, %s241
    %p243 = scmp.eq.s32.totalorder %s23, 0
    %p244 = por %p242, %p243
    %p245 = scmp.le.s32.totalorder 1, %s17
    %p246 = scmp.lt.s32.totalorder %s17, 5
    %p247 = pnand %p245, %p246
    %p248 = pneg %p247
    // Predicated region
    $region9: #{sequential_model_forward_t.1} parent=5 // pred_check
      _
    $region10: #{sequential_model_forward_t.1} parent=5 // pred_check_branch
      %250 = sbr.rel (%p247) target = $region12
    $region11: #{sequential_model_forward_t.1} parent=5 // pred_region
      %s251 = ssub.s32 %s17, 1
      // Predicated region
      $region13: #{sequential_model_forward_t.1} parent=11 // pred_check
        %p252 = pneg %p64
      $region14: #{sequential_model_forward_t.1} parent=11 // pred_check_branch
        %254 = sbr.rel (%p252) target = $region16
      $region15: #{sequential_model_forward_t.1} parent=11 // pred_region
        _
      $region16: #{sequential_model_forward_t.1} parent=11 // pred_fallthru
        _
      // Predicated region
      $region17: #{sequential_model_forward_t.1} parent=11 // pred_check
        %p255 = pneg %p85
      $region18: #{sequential_model_forward_t.1} parent=11 // pred_check_branch
        %257 = sbr.rel (%p255) target = $region20
      $region19: #{sequential_model_forward_t.1} parent=11 // pred_region
        _
      $region20: #{sequential_model_forward_t.1} parent=11 // pred_fallthru
        _
      // Predicated region
      $region21: #{sequential_model_forward_t.1} parent=11 // pred_check
        %p258 = pneg %p106
      $region22: #{sequential_model_forward_t.1} parent=11 // pred_check_branch
        %260 = sbr.rel (%p258) target = $region24
      $region23: #{sequential_model_forward_t.1} parent=11 // pred_region
        _
      $region24: #{sequential_model_forward_t.1} parent=11 // pred_fallthru
        _
      // Predicated region
      $region25: #{sequential_model_forward_t.1} parent=11 // pred_check
        %p261 = pneg %p127
      $region26: #{sequential_model_forward_t.1} parent=11 // pred_check_branch
        %263 = sbr.rel (%p261) target = $region28
      $region27: #{sequential_model_forward_t.1} parent=11 // pred_region
        _
      $region28: #{sequential_model_forward_t.1} parent=11 // pred_fallthru
        _
      // Predicated region
      $region29: #{sequential_model_forward_t.1} parent=11 // pred_check
        %p264 = pneg %p148
      $region30: #{sequential_model_forward_t.1} parent=11 // pred_check_branch
        %266 = sbr.rel (%p264) target = $region32
      $region31: #{sequential_model_forward_t.1} parent=11 // pred_region
        _
      $region32: #{sequential_model_forward_t.1} parent=11 // pred_fallthru
        _
      // Predicated region
      $region33: #{sequential_model_forward_t.1} parent=11 // pred_check
        %p267 = pneg %p169
      $region34: #{sequential_model_forward_t.1} parent=11 // pred_check_branch
        %269 = sbr.rel (%p267) target = $region36
      $region35: #{sequential_model_forward_t.1} parent=11 // pred_region
        _
      $region36: #{sequential_model_forward_t.1} parent=11 // pred_fallthru
        _
      // Predicated region
      $region37: #{sequential_model_forward_t.1} parent=11 // pred_check
        %p270 = pneg %p190
      $region38: #{sequential_model_forward_t.1} parent=11 // pred_check_branch
        %272 = sbr.rel (%p270) target = $region40
      $region39: #{sequential_model_forward_t.1} parent=11 // pred_region
        _
      $region40: #{sequential_model_forward_t.1} parent=11 // pred_fallthru
        _
      // Predicated region
      $region41: #{sequential_model_forward_t.1} parent=11 // pred_check
        %p273 = pneg %p211
      $region42: #{sequential_model_forward_t.1} parent=11 // pred_check_branch
        %275 = sbr.rel (%p273) target = $region44
      $region43: #{sequential_model_forward_t.1} parent=11 // pred_region
        _
      $region44: #{sequential_model_forward_t.1} parent=11 // pred_fallthru
        _
    $region12: #{sequential_model_forward_t.1} parent=5 // pred_fallthru
      _
    %p276 = scmp.lt.s32.totalorder %s17, 4
    // Predicated region
    $region45: #{sequential_model_forward_t.1} parent=5 // pred_check
      %p277 = pneg %p276
    $region46: #{sequential_model_forward_t.1} parent=5 // pred_check_branch
      %279 = sbr.rel (%p277) target = $region48
    $region47: #{sequential_model_forward_t.1} parent=5 // pred_region
      // Predicated region
      $region49: #{sequential_model_forward_t.1} parent=47 // pred_check
        %p280 = pneg %p37
      $region50: #{sequential_model_forward_t.1} parent=47 // pred_check_branch
        %282 = sbr.rel (%p280) target = $region52
      $region51: #{sequential_model_forward_t.1} parent=47 // pred_region
        %s283 = smul.u32 4, %s17
        %p284 = scmp.lt.s32.totalorder %s283, 15
        %s285 = scalar_select %p284, %s283, 15
        %s286 = smul.addr %s285, 2
        %s287 = scalar_lea.vmem %s0, %s286
        %s288 = smul.u32 4, %s17
      $region52: #{sequential_model_forward_t.1} parent=47 // pred_fallthru
        _
    $region48: #{sequential_model_forward_t.1} parent=5 // pred_fallthru
      _
    %p289 = scmp.le.s32.totalorder 1, %s17
    %p290 = scmp.lt.s32.totalorder %s17, 5
    %p291 = pnand %p289, %p290
    %p292 = pneg %p291
    // Predicated region
    $region53: #{sequential_model_forward_t.1} parent=5 // pred_check
      _
    $region54: #{sequential_model_forward_t.1} parent=5 // pred_check_branch
      %294 = sbr.rel (%p291) target = $region56
    $region55: #{sequential_model_forward_t.1} parent=5 // pred_region
      %s295 = ssub.s32 %s17, 1
      %s296 = smul.u32 4, %s22
      %p297 = scmp.lt.s32.totalorder %s296, 15
      %s298 = scalar_select %p297, %s296, 15
      %s299 = smul.addr %s298, 2
      %s300 = scalar_lea.vmem %s0, %s299
      %p301 = pneg %p43
      %p302 = pneg %p40
      %p303 = pneg %p64
      %p304 = pneg %p61
      %p305 = pneg %p85
      %p306 = pneg %p82
      %p307 = pneg %p106
      %p308 = pneg %p103
      %p309 = pneg %p127
      %p310 = pneg %p124
      %p311 = pneg %p148
      %p312 = pneg %p145
      %p313 = pneg %p169
      %p314 = pneg %p166
      %p315 = pneg %p190
      %p316 = pneg %p187
      %p317 = pneg %p211
      %p318 = pneg %p208
      %p319 = pneg %p237
      %p320 = pneg %p234
      %s321 = smul.u32 4, %s22
      %p322 = scmp.lt.s32.totalorder %s321, 15
      %s323 = scalar_select %p322, %s321, 15
      %s324 = scalar_lea.vmem %s9, %s323
      %s325 = smul.u32 4, %s22
      %p326 = scmp.lt.s32.totalorder %s325, 15
      %s327 = scalar_select %p326, %s325, 15
      %s328 = smul.addr %s327, 2
      %s329 = scalar_lea.vmem %s0, %s328
      %s330 = smul.u32 4, %s22
      %s331 = smul.u32 4, %s22
      %p332 = scmp.lt.s32.totalorder %s331, 15
      %s333 = scalar_select %p332, %s331, 15
      %s334 = scalar_lea.vmem %s9, %s333
      %s335 = smul.u32 4, %s22
      %v336 = vld [vmem:[%s329] ss:$2 sm:$0xf]
      %s337 = scalar_lea.vmem %s329, 1
      %v338 = vld [vmem:[%s337] ss:$2 sm:$0xf]
      %v339 = vld [vmem:[%s1] sm:$0xff]
      %v340 = vld [vmem:[%s1 + $0x8] sm:$0xff]
      %v341 = vld [vmem:[%s1 + $0x10] sm:$0xff]
      %v342 = vld [vmem:[%s1 + $0x18] sm:$0xff]
      %344 = vset.pattern.permute.xlu0 0
      %345 = vperm.xlu0 %344, %v339
      %v346 = vpop.permute.xlu0 %345
      %349 = vset.pattern.permute.xlu0 0
      %350 = vperm.xlu0 %349, %v340
      %v351 = vpop.permute.xlu0 %350
      %354 = vset.pattern.permute.xlu0 0
      %355 = vperm.xlu0 %354, %v341
      %v356 = vpop.permute.xlu0 %355
      %359 = vset.pattern.permute.xlu0 0
      %360 = vperm.xlu0 %359, %v342
      %v361 = vpop.permute.xlu0 %360
      %v364 = vlaneseq
      %v365 = vshrl.u32 %v364, 7
      %v366 = vsub.s32 0, %v365
      %v367 = vrot.slane %v336, %v366
      %v368 = vlaneseq
      %v369 = vshrl.u32 %v368, 7
      %v370 = vsub.s32 1, %v369
      %v371 = vrot.slane %v336, %v370
      %v372 = vlaneseq
      %v373 = vshrl.u32 %v372, 7
      %v374 = vsub.s32 2, %v373
      %v375 = vrot.slane %v336, %v374
      %v376 = vlaneseq
      %v377 = vshrl.u32 %v376, 7
      %v378 = vsub.s32 3, %v377
      %v379 = vrot.slane %v336, %v378
      %v384 = vmul.f32 %v346, %v367
      %v385 = vmul.f32 %v346, %v371
      %v386 = vmul.f32 %v346, %v375
      %v387 = vmul.f32 %v346, %v379
      %v388 = vmul.f32 %v351, %v367
      %v389 = vmul.f32 %v351, %v371
      %v390 = vmul.f32 %v351, %v375
      %v391 = vmul.f32 %v351, %v379
      %v392 = vmul.f32 %v356, %v367
      %v393 = vmul.f32 %v356, %v371
      %v394 = vmul.f32 %v356, %v375
      %v395 = vmul.f32 %v356, %v379
      %v396 = vmul.f32 %v361, %v367
      %v397 = vmul.f32 %v361, %v371
      %v398 = vmul.f32 %v361, %v375
      %v399 = vmul.f32 %v361, %v379
      %400 = vset.pattern.permute.xlu0 1
      %401 = vperm.xlu0 %400, %v339
      %v402 = vpop.permute.xlu0 %401
      %404 = vset.pattern.permute.xlu0 1
      %405 = vperm.xlu0 %404, %v340
      %v406 = vpop.permute.xlu0 %405
      %408 = vset.pattern.permute.xlu0 1
      %409 = vperm.xlu0 %408, %v341
      %v410 = vpop.permute.xlu0 %409
      %412 = vset.pattern.permute.xlu0 1
      %413 = vperm.xlu0 %412, %v342
      %v414 = vpop.permute.xlu0 %413
      %v417 = vlaneseq
      %v418 = vshrl.u32 %v417, 7
      %v419 = vsub.s32 0, %v418
      %v420 = vrot.slane %v338, %v419
      %v421 = vlaneseq
      %v422 = vshrl.u32 %v421, 7
      %v423 = vsub.s32 1, %v422
      %v424 = vrot.slane %v338, %v423
      %v425 = vlaneseq
      %v426 = vshrl.u32 %v425, 7
      %v427 = vsub.s32 2, %v426
      %v428 = vrot.slane %v338, %v427
      %v429 = vlaneseq
      %v430 = vshrl.u32 %v429, 7
      %v431 = vsub.s32 3, %v430
      %v432 = vrot.slane %v338, %v431
      %v437 = vmul.f32 %v402, %v420
      %v438 = vmul.f32 %v402, %v424
      %v439 = vmul.f32 %v402, %v428
      %v440 = vmul.f32 %v402, %v432
      %v441 = vmul.f32 %v406, %v420
      %v442 = vmul.f32 %v406, %v424
      %v443 = vmul.f32 %v406, %v428
      %v444 = vmul.f32 %v406, %v432
      %v445 = vmul.f32 %v410, %v420
      %v446 = vmul.f32 %v410, %v424
      %v447 = vmul.f32 %v410, %v428
      %v448 = vmul.f32 %v410, %v432
      %v449 = vmul.f32 %v414, %v420
      %v450 = vmul.f32 %v414, %v424
      %v451 = vmul.f32 %v414, %v428
      %v452 = vmul.f32 %v414, %v432
      %v453 = vadd.f32 %v384, %v437
      %v454 = vadd.f32 %v385, %v438
      %v455 = vadd.f32 %v386, %v439
      %v456 = vadd.f32 %v387, %v440
      %v457 = vadd.f32 %v388, %v441
      %v458 = vadd.f32 %v389, %v442
      %v459 = vadd.f32 %v390, %v443
      %v460 = vadd.f32 %v391, %v444
      %v461 = vadd.f32 %v392, %v445
      %v462 = vadd.f32 %v393, %v446
      %v463 = vadd.f32 %v394, %v447
      %v464 = vadd.f32 %v395, %v448
      %v465 = vadd.f32 %v396, %v449
      %v466 = vadd.f32 %v397, %v450
      %v467 = vadd.f32 %v398, %v451
      %v468 = vadd.f32 %v399, %v452
      %v469 = vld [vmem:[%s2] sm:$0xff]
      %v470 = vld [vmem:[%s2 + $0x8] sm:$0xff]
      %v471 = vld [vmem:[%s2 + $0x10] sm:$0xff]
      %v472 = vld [vmem:[%s2 + $0x18] sm:$0xff]
      %474 = vset.pattern.permute.xlu0 0
      %475 = vperm.xlu0 %474, %v469
      %v476 = vpop.permute.xlu0 %475
      %479 = vset.pattern.permute.xlu0 0
      %480 = vperm.xlu0 %479, %v470
      %v481 = vpop.permute.xlu0 %480
      %484 = vset.pattern.permute.xlu0 0
      %485 = vperm.xlu0 %484, %v471
      %v486 = vpop.permute.xlu0 %485
      %489 = vset.pattern.permute.xlu0 0
      %490 = vperm.xlu0 %489, %v472
      %v491 = vpop.permute.xlu0 %490
      %v493 = vadd.f32 %v453, %v476
      %v494 = vadd.f32 %v454, %v476
      %v495 = vadd.f32 %v455, %v476
      %v496 = vadd.f32 %v456, %v476
      %v497 = vadd.f32 %v457, %v481
      %v498 = vadd.f32 %v458, %v481
      %v499 = vadd.f32 %v459, %v481
      %v500 = vadd.f32 %v460, %v481
      %v501 = vadd.f32 %v461, %v486
      %v502 = vadd.f32 %v462, %v486
      %v503 = vadd.f32 %v463, %v486
      %v504 = vadd.f32 %v464, %v486
      %v505 = vadd.f32 %v465, %v491
      %v506 = vadd.f32 %v466, %v491
      %v507 = vadd.f32 %v467, %v491
      %v508 = vadd.f32 %v468, %v491
      %v509 = vtanh.pop %v493
      %v510 = vtanh.pop %v494
      %v511 = vtanh.pop %v495
      %v512 = vtanh.pop %v496
      %v513 = vtanh.pop %v497
      %v514 = vtanh.pop %v498
      %v515 = vtanh.pop %v499
      %v516 = vtanh.pop %v500
      %v517 = vtanh.pop %v501
      %v518 = vtanh.pop %v502
      %v519 = vtanh.pop %v503
      %v520 = vtanh.pop %v504
      %v521 = vtanh.pop %v505
      %v522 = vtanh.pop %v506
      %v523 = vtanh.pop %v507
      %v524 = vtanh.pop %v508
      %v525 = vld [vmem:[%s3] sm:$0xff]
      %v526 = vld [vmem:[%s3 + $0x8] sm:$0xff]
      %v527 = vld [vmem:[%s3 + $0x10] sm:$0xff]
      %v528 = vld [vmem:[%s3 + $0x18] sm:$0xff]
      %v529 = vld [vmem:[%s4] sm:$0xff]
      %v530 = vld [vmem:[%s4 + $0x8] sm:$0xff]
      %v531 = vld [vmem:[%s4 + $0x10] sm:$0xff]
      %v532 = vld [vmem:[%s4 + $0x18] sm:$0xff]
      %534 = vset.pattern.permute.xlu0 0
      %535 = vperm.xlu0 %534, %v529
      %v536 = vpop.permute.xlu0 %535
      %539 = vset.pattern.permute.xlu0 0
      %540 = vperm.xlu0 %539, %v530
      %v541 = vpop.permute.xlu0 %540
      %544 = vset.pattern.permute.xlu0 0
      %545 = vperm.xlu0 %544, %v531
      %v546 = vpop.permute.xlu0 %545
      %549 = vset.pattern.permute.xlu0 0
      %550 = vperm.xlu0 %549, %v532
      %v551 = vpop.permute.xlu0 %550
      %vm553 = vcmask 261120
      %v555 = vsel %vm553, %v525, 0
      %v558 = vsel %vm553, %v526, 0
      %v561 = vsel %vm553, %v527, 0
      %v564 = vsel %vm553, %v528, 0
      %566 = vmatprep.subr.mxu0 %v510
      %567 = vmatpush1.msra.mxu0 %v509
      %568 = vmatprep.subr.mxu0 %v514
      %569 = vmatpush1.msra.mxu0 %v513
      %570 = vmatprep.subr.mxu0 %v518
      %571 = vmatpush1.msra.mxu0 %v517
      %572 = vmatprep.subr.mxu0 %v522
      %573 = vmatpush1.msra.mxu0 %v521
      %574 = vmatprep.subr.mxu0 0.0
      %575 = vmatpush1.msra.mxu0 0.0
      %576 = vmatprep.subr.mxu0 0.0
      %577 = vmatpush1.msra.mxu0 0.0
      %578 = vmatprep.subr.mxu0 0.0
      %579 = vmatpush1.msra.mxu0 0.0
      %580 = vmatprep.subr.mxu0 0.0
      %581 = vmatpush1.msra.mxu0 0.0
      %582 = vmatprep.subr.mxu0 0.0
      %583 = vmatpush1.msra.mxu0 0.0
      %584 = vmatprep.subr.mxu0 0.0
      %585 = vmatpush1.msra.mxu0 0.0
      %586 = vmatprep.subr.mxu0 0.0
      %587 = vmatpush1.msra.mxu0 0.0
      %588 = vmatprep.subr.mxu0 0.0
      %589 = vmatpush1.msra.mxu0 0.0
      %590 = vmatprep.subr.mxu0 0.0
      %591 = vmatpush1.msra.mxu0 0.0
      %592 = vmatprep.subr.mxu0 0.0
      %593 = vmatpush1.msra.mxu0 0.0
      %594 = vmatprep.subr.mxu0 0.0
      %595 = vmatpush1.msra.mxu0 0.0
      %596 = vmatprep.subr.mxu0 0.0
      %597 = vmatpush1.msra.mxu0 0.0
      %598 = vmatprep.subr.mxu0 0.0
      %599 = vmatpush1.msra.mxu0 0.0
      %600 = vmatprep.subr.mxu0 0.0
      %601 = vmatpush1.msra.mxu0 0.0
      %602 = vmatprep.subr.mxu0 0.0
      %603 = vmatpush1.msra.mxu0 0.0
      %604 = vmatprep.subr.mxu0 0.0
      %605 = vmatpush1.msra.mxu0 0.0
      %606 = vmatprep.subr.mxu0 0.0
      %607 = vmatpush1.msra.mxu0 0.0
      %608 = vmatprep.subr.mxu0 0.0
      %609 = vmatpush1.msra.mxu0 0.0
      %610 = vmatprep.subr.mxu0 0.0
      %611 = vmatpush1.msra.mxu0 0.0
      %612 = vmatprep.subr.mxu0 0.0
      %613 = vmatpush1.msra.mxu0 0.0
      %614 = vmatprep.subr.mxu0 0.0
      %615 = vmatpush1.msra.mxu0 0.0
      %616 = vmatprep.subr.mxu0 0.0
      %617 = vmatpush1.msra.mxu0 0.0
      %618 = vmatprep.subr.mxu0 0.0
      %619 = vmatpush1.msra.mxu0 0.0
      %620 = vmatprep.subr.mxu0 0.0
      %621 = vmatpush1.msra.mxu0 0.0
      %622 = vmatprep.subr.mxu0 0.0
      %623 = vmatpush1.msra.mxu0 0.0
      %624 = vmatprep.subr.mxu0 0.0
      %625 = vmatpush1.msra.mxu0 0.0
      %626 = vmatprep.subr.mxu0 0.0
      %627 = vmatpush1.msra.mxu0 0.0
      %628 = vmatprep.subr.mxu0 0.0
      %629 = vmatpush1.msra.mxu0 0.0
      %630 = vmatprep.mubr.f32.mxu0 0.0
      %631 = vmatmul.mubr.f32.gmra.mrb[0].mxu0 %v555
      %v632 = vpop.f32.mrb[0].mxu0
      %v633 = vadd.f32 %v536, %v632
      %v634 = vpop.f32.mrb[0].mxu0
      %v635 = vadd.f32 %v536, %v634
      %636 = vmatprep.mubr.f32.mxu0 0.0
      %637 = vmatmul.mubr.f32.gmra.mrb[0].mxu0 %v558
      %v638 = vpop.f32.mrb[0].mxu0
      %v639 = vadd.f32 %v541, %v638
      %v640 = vpop.f32.mrb[0].mxu0
      %v641 = vadd.f32 %v541, %v640
      %642 = vmatprep.mubr.f32.mxu0 0.0
      %643 = vmatmul.mubr.f32.gmra.mrb[0].mxu0 %v561
      %v644 = vpop.f32.mrb[0].mxu0
      %v645 = vadd.f32 %v546, %v644
      %v646 = vpop.f32.mrb[0].mxu0
      %v647 = vadd.f32 %v546, %v646
      %648 = vmatprep.mubr.f32.mxu0 0.0
      %649 = vmatmul.mubr.f32.gmra.mrb[0].mxu0 %v564
      %v650 = vpop.f32.mrb[0].mxu0
      %v651 = vadd.f32 %v551, %v650
      %v652 = vpop.f32.mrb[0].mxu0
      %v653 = vadd.f32 %v551, %v652
      %654 = vdwg.mxu0
      %655 = vmatprep.subr.mxu0 %v512
      %656 = vmatpush1.msra.mxu0 %v511
      %657 = vmatprep.subr.mxu0 %v516
      %658 = vmatpush1.msra.mxu0 %v515
      %659 = vmatprep.subr.mxu0 %v520
      %660 = vmatpush1.msra.mxu0 %v519
      %661 = vmatprep.subr.mxu0 %v524
      %662 = vmatpush1.msra.mxu0 %v523
      %663 = vmatprep.subr.mxu0 0.0
      %664 = vmatpush1.msra.mxu0 0.0
      %665 = vmatprep.subr.mxu0 0.0
      %666 = vmatpush1.msra.mxu0 0.0
      %667 = vmatprep.subr.mxu0 0.0
      %668 = vmatpush1.msra.mxu0 0.0
      %669 = vmatprep.subr.mxu0 0.0
      %670 = vmatpush1.msra.mxu0 0.0
      %671 = vmatprep.subr.mxu0 0.0
      %672 = vmatpush1.msra.mxu0 0.0
      %673 = vmatprep.subr.mxu0 0.0
      %674 = vmatpush1.msra.mxu0 0.0
      %675 = vmatprep.subr.mxu0 0.0
      %676 = vmatpush1.msra.mxu0 0.0
      %677 = vmatprep.subr.mxu0 0.0
      %678 = vmatpush1.msra.mxu0 0.0
      %679 = vmatprep.subr.mxu0 0.0
      %680 = vmatpush1.msra.mxu0 0.0
      %681 = vmatprep.subr.mxu0 0.0
      %682 = vmatpush1.msra.mxu0 0.0
      %683 = vmatprep.subr.mxu0 0.0
      %684 = vmatpush1.msra.mxu0 0.0
      %685 = vmatprep.subr.mxu0 0.0
      %686 = vmatpush1.msra.mxu0 0.0
      %687 = vmatprep.subr.mxu0 0.0
      %688 = vmatpush1.msra.mxu0 0.0
      %689 = vmatprep.subr.mxu0 0.0
      %690 = vmatpush1.msra.mxu0 0.0
      %691 = vmatprep.subr.mxu0 0.0
      %692 = vmatpush1.msra.mxu0 0.0
      %693 = vmatprep.subr.mxu0 0.0
      %694 = vmatpush1.msra.mxu0 0.0
      %695 = vmatprep.subr.mxu0 0.0
      %696 = vmatpush1.msra.mxu0 0.0
      %697 = vmatprep.subr.mxu0 0.0
      %698 = vmatpush1.msra.mxu0 0.0
      %699 = vmatprep.subr.mxu0 0.0
      %700 = vmatpush1.msra.mxu0 0.0
      %701 = vmatprep.subr.mxu0 0.0
      %702 = vmatpush1.msra.mxu0 0.0
      %703 = vmatprep.subr.mxu0 0.0
      %704 = vmatpush1.msra.mxu0 0.0
      %705 = vmatprep.subr.mxu0 0.0
      %706 = vmatpush1.msra.mxu0 0.0
      %707 = vmatprep.subr.mxu0 0.0
      %708 = vmatpush1.msra.mxu0 0.0
      %709 = vmatprep.subr.mxu0 0.0
      %710 = vmatpush1.msra.mxu0 0.0
      %711 = vmatprep.subr.mxu0 0.0
      %712 = vmatpush1.msra.mxu0 0.0
      %713 = vmatprep.subr.mxu0 0.0
      %714 = vmatpush1.msra.mxu0 0.0
      %715 = vmatprep.subr.mxu0 0.0
      %716 = vmatpush1.msra.mxu0 0.0
      %717 = vmatprep.subr.mxu0 0.0
      %718 = vmatpush1.msra.mxu0 0.0
      %719 = vmatprep.mubr.f32.mxu0 0.0
      %720 = vmatmul.mubr.f32.gmra.mrb[0].mxu0 %v555
      %v721 = vpop.f32.mrb[0].mxu0
      %v722 = vadd.f32 %v536, %v721
      %v723 = vpop.f32.mrb[0].mxu0
      %v724 = vadd.f32 %v536, %v723
      %725 = vmatprep.mubr.f32.mxu0 0.0
      %726 = vmatmul.mubr.f32.gmra.mrb[0].mxu0 %v558
      %v727 = vpop.f32.mrb[0].mxu0
      %v728 = vadd.f32 %v541, %v727
      %v729 = vpop.f32.mrb[0].mxu0
      %v730 = vadd.f32 %v541, %v729
      %731 = vmatprep.mubr.f32.mxu0 0.0
      %732 = vmatmul.mubr.f32.gmra.mrb[0].mxu0 %v561
      %v733 = vpop.f32.mrb[0].mxu0
      %v734 = vadd.f32 %v546, %v733
      %v735 = vpop.f32.mrb[0].mxu0
      %v736 = vadd.f32 %v546, %v735
      %737 = vmatprep.mubr.f32.mxu0 0.0
      %738 = vmatmul.mubr.f32.gmra.mrb[0].mxu0 %v564
      %v739 = vpop.f32.mrb[0].mxu0
      %v740 = vadd.f32 %v551, %v739
      %v741 = vpop.f32.mrb[0].mxu0
      %v742 = vadd.f32 %v551, %v741
      %743 = vdwg.mxu0
      %v744 = vtanh.pop %v633
      %v745 = vtanh.pop %v635
      %v746 = vtanh.pop %v722
      %v747 = vtanh.pop %v724
      %v748 = vtanh.pop %v639
      %v749 = vtanh.pop %v641
      %v750 = vtanh.pop %v728
      %v751 = vtanh.pop %v730
      %v752 = vtanh.pop %v645
      %v753 = vtanh.pop %v647
      %v754 = vtanh.pop %v734
      %v755 = vtanh.pop %v736
      %v756 = vtanh.pop %v651
      %v757 = vtanh.pop %v653
      %v758 = vtanh.pop %v740
      %v759 = vtanh.pop %v742
      %v760 = vld [vmem:[%s5] sm:$0xff]
      %v761 = vld [vmem:[%s5 + $0x8] sm:$0xff]
      %v762 = vld [vmem:[%s5 + $0x10] sm:$0xff]
      %v763 = vld [vmem:[%s5 + $0x18] sm:$0xff]
      %v764 = vld [vmem:[%s6] sm:$0xff]
      %v765 = vld [vmem:[%s6 + $0x8] sm:$0xff]
      %v766 = vld [vmem:[%s6 + $0x10] sm:$0xff]
      %v767 = vld [vmem:[%s6 + $0x18] sm:$0xff]
      %769 = vset.pattern.permute.xlu0 0
      %770 = vperm.xlu0 %769, %v764
      %v771 = vpop.permute.xlu0 %770
      %774 = vset.pattern.permute.xlu0 0
      %775 = vperm.xlu0 %774, %v765
      %v776 = vpop.permute.xlu0 %775
      %779 = vset.pattern.permute.xlu0 0
      %780 = vperm.xlu0 %779, %v766
      %v781 = vpop.permute.xlu0 %780
      %784 = vset.pattern.permute.xlu0 0
      %785 = vperm.xlu0 %784, %v767
      %v786 = vpop.permute.xlu0 %785
      %v789 = vsel %vm553, %v760, 0
      %v792 = vsel %vm553, %v761, 0
      %v795 = vsel %vm553, %v762, 0
      %v798 = vsel %vm553, %v763, 0
      %800 = vmatprep.subr.mxu0 %v745
      %801 = vmatpush1.msra.mxu0 %v744
      %802 = vmatprep.subr.mxu0 %v749
      %803 = vmatpush1.msra.mxu0 %v748
      %804 = vmatprep.subr.mxu0 %v753
      %805 = vmatpush1.msra.mxu0 %v752
      %806 = vmatprep.subr.mxu0 %v757
      %807 = vmatpush1.msra.mxu0 %v756
      %808 = vmatprep.subr.mxu0 0.0
      %809 = vmatpush1.msra.mxu0 0.0
      %810 = vmatprep.subr.mxu0 0.0
      %811 = vmatpush1.msra.mxu0 0.0
      %812 = vmatprep.subr.mxu0 0.0
      %813 = vmatpush1.msra.mxu0 0.0
      %814 = vmatprep.subr.mxu0 0.0
      %815 = vmatpush1.msra.mxu0 0.0
      %816 = vmatprep.subr.mxu0 0.0
      %817 = vmatpush1.msra.mxu0 0.0
      %818 = vmatprep.subr.mxu0 0.0
      %819 = vmatpush1.msra.mxu0 0.0
      %820 = vmatprep.subr.mxu0 0.0
      %821 = vmatpush1.msra.mxu0 0.0
      %822 = vmatprep.subr.mxu0 0.0
      %823 = vmatpush1.msra.mxu0 0.0
      %824 = vmatprep.subr.mxu0 0.0
      %825 = vmatpush1.msra.mxu0 0.0
      %826 = vmatprep.subr.mxu0 0.0
      %827 = vmatpush1.msra.mxu0 0.0
      %828 = vmatprep.subr.mxu0 0.0
      %829 = vmatpush1.msra.mxu0 0.0
      %830 = vmatprep.subr.mxu0 0.0
      %831 = vmatpush1.msra.mxu0 0.0
      %832 = vmatprep.subr.mxu0 0.0
      %833 = vmatpush1.msra.mxu0 0.0
      %834 = vmatprep.subr.mxu0 0.0
      %835 = vmatpush1.msra.mxu0 0.0
      %836 = vmatprep.subr.mxu0 0.0
      %837 = vmatpush1.msra.mxu0 0.0
      %838 = vmatprep.subr.mxu0 0.0
      %839 = vmatpush1.msra.mxu0 0.0
      %840 = vmatprep.subr.mxu0 0.0
      %841 = vmatpush1.msra.mxu0 0.0
      %842 = vmatprep.subr.mxu0 0.0
      %843 = vmatpush1.msra.mxu0 0.0
      %844 = vmatprep.subr.mxu0 0.0
      %845 = vmatpush1.msra.mxu0 0.0
      %846 = vmatprep.subr.mxu0 0.0
      %847 = vmatpush1.msra.mxu0 0.0
      %848 = vmatprep.subr.mxu0 0.0
      %849 = vmatpush1.msra.mxu0 0.0
      %850 = vmatprep.subr.mxu0 0.0
      %851 = vmatpush1.msra.mxu0 0.0
      %852 = vmatprep.subr.mxu0 0.0
      %853 = vmatpush1.msra.mxu0 0.0
      %854 = vmatprep.subr.mxu0 0.0
      %855 = vmatpush1.msra.mxu0 0.0
      %856 = vmatprep.subr.mxu0 0.0
      %857 = vmatpush1.msra.mxu0 0.0
      %858 = vmatprep.subr.mxu0 0.0
      %859 = vmatpush1.msra.mxu0 0.0
      %860 = vmatprep.subr.mxu0 0.0
      %861 = vmatpush1.msra.mxu0 0.0
      %862 = vmatprep.subr.mxu0 0.0
      %863 = vmatpush1.msra.mxu0 0.0
      %864 = vmatprep.mubr.f32.mxu0 0.0
      %865 = vmatmul.mubr.f32.gmra.mrb[0].mxu0 %v789
      %v866 = vpop.f32.mrb[0].mxu0
      %v867 = vadd.f32 %v771, %v866
      %v868 = vpop.f32.mrb[0].mxu0
      %v869 = vadd.f32 %v771, %v868
      %870 = vmatprep.mubr.f32.mxu0 0.0
      %871 = vmatmul.mubr.f32.gmra.mrb[0].mxu0 %v792
      %v872 = vpop.f32.mrb[0].mxu0
      %v873 = vadd.f32 %v776, %v872
      %v874 = vpop.f32.mrb[0].mxu0
      %v875 = vadd.f32 %v776, %v874
      %876 = vmatprep.mubr.f32.mxu0 0.0
      %877 = vmatmul.mubr.f32.gmra.mrb[0].mxu0 %v795
      %v878 = vpop.f32.mrb[0].mxu0
      %v879 = vadd.f32 %v781, %v878
      %v880 = vpop.f32.mrb[0].mxu0
      %v881 = vadd.f32 %v781, %v880
      %882 = vmatprep.mubr.f32.mxu0 0.0
      %883 = vmatmul.mubr.f32.gmra.mrb[0].mxu0 %v798
      %v884 = vpop.f32.mrb[0].mxu0
      %v885 = vadd.f32 %v786, %v884
      %v886 = vpop.f32.mrb[0].mxu0
      %v887 = vadd.f32 %v786, %v886
      %888 = vdwg.mxu0
      %889 = vmatprep.subr.mxu0 %v747
      %890 = vmatpush1.msra.mxu0 %v746
      %891 = vmatprep.subr.mxu0 %v751
      %892 = vmatpush1.msra.mxu0 %v750
      %893 = vmatprep.subr.mxu0 %v755
      %894 = vmatpush1.msra.mxu0 %v754
      %895 = vmatprep.subr.mxu0 %v759
      %896 = vmatpush1.msra.mxu0 %v758
      %897 = vmatprep.subr.mxu0 0.0
      %898 = vmatpush1.msra.mxu0 0.0
      %899 = vmatprep.subr.mxu0 0.0
      %900 = vmatpush1.msra.mxu0 0.0
      %901 = vmatprep.subr.mxu0 0.0
      %902 = vmatpush1.msra.mxu0 0.0
      %903 = vmatprep.subr.mxu0 0.0
      %904 = vmatpush1.msra.mxu0 0.0
      %905 = vmatprep.subr.mxu0 0.0
      %906 = vmatpush1.msra.mxu0 0.0
      %907 = vmatprep.subr.mxu0 0.0
      %908 = vmatpush1.msra.mxu0 0.0
      %909 = vmatprep.subr.mxu0 0.0
      %910 = vmatpush1.msra.mxu0 0.0
      %911 = vmatprep.subr.mxu0 0.0
      %912 = vmatpush1.msra.mxu0 0.0
      %913 = vmatprep.subr.mxu0 0.0
      %914 = vmatpush1.msra.mxu0 0.0
      %915 = vmatprep.subr.mxu0 0.0
      %916 = vmatpush1.msra.mxu0 0.0
      %917 = vmatprep.subr.mxu0 0.0
      %918 = vmatpush1.msra.mxu0 0.0
      %919 = vmatprep.subr.mxu0 0.0
      %920 = vmatpush1.msra.mxu0 0.0
      %921 = vmatprep.subr.mxu0 0.0
      %922 = vmatpush1.msra.mxu0 0.0
      %923 = vmatprep.subr.mxu0 0.0
      %924 = vmatpush1.msra.mxu0 0.0
      %925 = vmatprep.subr.mxu0 0.0
      %926 = vmatpush1.msra.mxu0 0.0
      %927 = vmatprep.subr.mxu0 0.0
      %928 = vmatpush1.msra.mxu0 0.0
      %929 = vmatprep.subr.mxu0 0.0
      %930 = vmatpush1.msra.mxu0 0.0
      %931 = vmatprep.subr.mxu0 0.0
      %932 = vmatpush1.msra.mxu0 0.0
      %933 = vmatprep.subr.mxu0 0.0
      %934 = vmatpush1.msra.mxu0 0.0
      %935 = vmatprep.subr.mxu0 0.0
      %936 = vmatpush1.msra.mxu0 0.0
      %937 = vmatprep.subr.mxu0 0.0
      %938 = vmatpush1.msra.mxu0 0.0
      %939 = vmatprep.subr.mxu0 0.0
      %940 = vmatpush1.msra.mxu0 0.0
      %941 = vmatprep.subr.mxu0 0.0
      %942 = vmatpush1.msra.mxu0 0.0
      %943 = vmatprep.subr.mxu0 0.0
      %944 = vmatpush1.msra.mxu0 0.0
      %945 = vmatprep.subr.mxu0 0.0
      %946 = vmatpush1.msra.mxu0 0.0
      %947 = vmatprep.subr.mxu0 0.0
      %948 = vmatpush1.msra.mxu0 0.0
      %949 = vmatprep.subr.mxu0 0.0
      %950 = vmatpush1.msra.mxu0 0.0
      %951 = vmatprep.subr.mxu0 0.0
      %952 = vmatpush1.msra.mxu0 0.0
      %953 = vmatprep.mubr.f32.mxu0 0.0
      %954 = vmatmul.mubr.f32.gmra.mrb[0].mxu0 %v789
      %v955 = vpop.f32.mrb[0].mxu0
      %v956 = vadd.f32 %v771, %v955
      %v957 = vpop.f32.mrb[0].mxu0
      %v958 = vadd.f32 %v771, %v957
      %959 = vmatprep.mubr.f32.mxu0 0.0
      %960 = vmatmul.mubr.f32.gmra.mrb[0].mxu0 %v792
      %v961 = vpop.f32.mrb[0].mxu0
      %v962 = vadd.f32 %v776, %v961
      %v963 = vpop.f32.mrb[0].mxu0
      %v964 = vadd.f32 %v776, %v963
      %965 = vmatprep.mubr.f32.mxu0 0.0
      %966 = vmatmul.mubr.f32.gmra.mrb[0].mxu0 %v795
      %v967 = vpop.f32.mrb[0].mxu0
      %v968 = vadd.f32 %v781, %v967
      %v969 = vpop.f32.mrb[0].mxu0
      %v970 = vadd.f32 %v781, %v969
      %971 = vmatprep.mubr.f32.mxu0 0.0
      %972 = vmatmul.mubr.f32.gmra.mrb[0].mxu0 %v798
      %v973 = vpop.f32.mrb[0].mxu0
      %v974 = vadd.f32 %v786, %v973
      %v975 = vpop.f32.mrb[0].mxu0
      %v976 = vadd.f32 %v786, %v975
      %977 = vdwg.mxu0
      %v978 = vtanh.pop %v867
      %v979 = vtanh.pop %v869
      %v980 = vtanh.pop %v956
      %v981 = vtanh.pop %v958
      %v982 = vtanh.pop %v873
      %v983 = vtanh.pop %v875
      %v984 = vtanh.pop %v962
      %v985 = vtanh.pop %v964
      %v986 = vtanh.pop %v879
      %v987 = vtanh.pop %v881
      %v988 = vtanh.pop %v968
      %v989 = vtanh.pop %v970
      %v990 = vtanh.pop %v885
      %v991 = vtanh.pop %v887
      %v992 = vtanh.pop %v974
      %v993 = vtanh.pop %v976
      %v994 = vld [vmem:[%s7] sm:$0xff]
      %v995 = vld [vmem:[%s7 + $0x8] sm:$0xff]
      %v996 = vld [vmem:[%s7 + $0x10] sm:$0xff]
      %v997 = vld [vmem:[%s7 + $0x18] sm:$0xff]
      %999 = vset.pattern.permute.xlu0 0
      %1000 = vperm.xlu0 %999, %v994
      %v1001 = vpop.permute.xlu0 %1000
      %1004 = vset.pattern.permute.xlu0 0
      %1005 = vperm.xlu0 %1004, %v995
      %v1006 = vpop.permute.xlu0 %1005
      %1009 = vset.pattern.permute.xlu0 0
      %1010 = vperm.xlu0 %1009, %v996
      %v1011 = vpop.permute.xlu0 %1010
      %1014 = vset.pattern.permute.xlu0 0
      %1015 = vperm.xlu0 %1014, %v997
      %v1016 = vpop.permute.xlu0 %1015
      %v1018 = vmul.f32 %v978, %v1001
      %v1019 = vmul.f32 %v979, %v1001
      %v1020 = vmul.f32 %v980, %v1001
      %v1021 = vmul.f32 %v981, %v1001
      %v1022 = vmul.f32 %v982, %v1006
      %v1023 = vmul.f32 %v983, %v1006
      %v1024 = vmul.f32 %v984, %v1006
      %v1025 = vmul.f32 %v985, %v1006
      %v1026 = vmul.f32 %v986, %v1011
      %v1027 = vmul.f32 %v987, %v1011
      %v1028 = vmul.f32 %v988, %v1011
      %v1029 = vmul.f32 %v989, %v1011
      %v1030 = vmul.f32 %v990, %v1016
      %v1031 = vmul.f32 %v991, %v1016
      %v1032 = vmul.f32 %v992, %v1016
      %v1033 = vmul.f32 %v993, %v1016
      %v1034 = vadd.f32 %v1018, %v1022
      %v1035 = vadd.f32 %v1034, %v1026
      %v1036 = vadd.f32 %v1035, %v1030
      %v1037 = vrot.slane %v1036, 4
      %v1038 = vadd.f32 %v1036, %v1037
      %v1039 = vrot.slane %v1038, 2
      %v1040 = vadd.f32 %v1038, %v1039
      %v1041 = vrot.slane %v1040, 1
      %v1042 = vadd.f32 %v1040, %v1041
      %v1043 = vadd.f32 %v1019, %v1023
      %v1044 = vadd.f32 %v1043, %v1027
      %v1045 = vadd.f32 %v1044, %v1031
      %v1046 = vrot.slane %v1045, 4
      %v1047 = vadd.f32 %v1045, %v1046
      %v1048 = vrot.slane %v1047, 2
      %v1049 = vadd.f32 %v1047, %v1048
      %v1050 = vrot.slane %v1049, 1
      %v1051 = vadd.f32 %v1049, %v1050
      %v1052 = vadd.f32 %v1020, %v1024
      %v1053 = vadd.f32 %v1052, %v1028
      %v1054 = vadd.f32 %v1053, %v1032
      %v1055 = vrot.slane %v1054, 4
      %v1056 = vadd.f32 %v1054, %v1055
      %v1057 = vrot.slane %v1056, 2
      %v1058 = vadd.f32 %v1056, %v1057
      %v1059 = vrot.slane %v1058, 1
      %v1060 = vadd.f32 %v1058, %v1059
      %v1061 = vadd.f32 %v1021, %v1025
      %v1062 = vadd.f32 %v1061, %v1029
      %v1063 = vadd.f32 %v1062, %v1033
      %v1064 = vrot.slane %v1063, 4
      %v1065 = vadd.f32 %v1063, %v1064
      %v1066 = vrot.slane %v1065, 2
      %v1067 = vadd.f32 %v1065, %v1066
      %v1068 = vrot.slane %v1067, 1
      %v1069 = vadd.f32 %v1067, %v1068
      %v1070 = vld [vmem:[#allocation2] sm:$0x1]
      %1072 = vset.pattern.permute.xlu0 0
      %1073 = vperm.xlu0 %1072, %v1070
      %v1074 = vpop.permute.xlu0 %1073
      %v1076 = vlaneseq
      %v1077 = vshrl.u32 %v1076, 7
      %v1078 = vsub.s32 0, %v1077
      %v1079 = vrot.slane %v1074, %v1078
      %v1080 = vadd.f32 %v1042, %v1079
      %v1081 = vadd.f32 %v1051, %v1079
      %v1082 = vadd.f32 %v1060, %v1079
      %v1083 = vadd.f32 %v1069, %v1079
      %v1088 = vcombine.low %v1080, %v1081
      %v1089 = vcombine.low %v1082, %v1083
      %v1091 = vunpack.c.l.s4 1966171168
      %v1092 = vunpack.c.0.s8 %v1091
      %v1093 = vlaneseq
      %v1094 = vshrl.u32 %v1093, 7
      %v1095 = vsub.s32 %v1092, %v1094
      %v1096 = vrot.slane %v1088, %v1095
      %v1098 = vunpack.c.l.s4 1966171168
      %v1099 = vunpack.c.0.s8 %v1098
      %v1100 = vlaneseq
      %v1101 = vshrl.u32 %v1100, 7
      %v1102 = vsub.s32 %v1099, %v1101
      %v1103 = vrot.slane %v1089, %v1102
      %v1104 = vcombine.low %v1096, %v1103
      %v1106 = vunpack.c.l.s4 1966171168
      %v1107 = vunpack.c.0.s8 %v1106
      %v1108 = vlaneseq
      %v1109 = vshrl.u32 %v1108, 7
      %v1110 = vsub.s32 %v1107, %v1109
      %v1111 = vrot.slane %v1104, %v1110
      %v1113 = vlaneseq
      %vm1114 = vcmp.ge.s32.totalorder %v1113, 0
      %vm1115 = vcmp.lt.s32.totalorder %v1113, 512
      %vm1116 = vmand %vm1114, %vm1115
      %1117 = vst.msk [vmem:[%s334] sm:$0xf] %vm1116, %v1111
      %s1118 = smul.u32 4, %s22
      %p1119 = scmp.lt.s32.totalorder %s1118, 15
      %s1120 = scalar_select %p1119, %s1118, 15
      %s1121 = scalar_lea.vmem %s9, %s1120
      // Predicated region
      $region57: #{sequential_model_forward_t.1} parent=55 // pred_check
        %p1122 = pneg %p234
      $region58: #{sequential_model_forward_t.1} parent=55 // pred_check_branch
        %1124 = sbr.rel (%p1122) target = $region60
      $region59: #{sequential_model_forward_t.1} parent=55 // pred_region
        %s1125 = smul.u32 4, %s22
      $region60: #{sequential_model_forward_t.1} parent=55 // pred_fallthru
        _
    $region56: #{sequential_model_forward_t.1} parent=5 // pred_fallthru
      _
    %p1126 = scmp.le.s32.totalorder 2, %s17
    // Predicated region
    $region61: #{sequential_model_forward_t.1} parent=5 // pred_check
      %p1127 = pneg %p1126
    $region62: #{sequential_model_forward_t.1} parent=5 // pred_check_branch
      %1129 = sbr.rel (%p1127) target = $region64
    $region63: #{sequential_model_forward_t.1} parent=5 // pred_region
      %s1130 = ssub.s32 %s17, 2
      // Predicated region
      $region65: #{sequential_model_forward_t.1} parent=63 // pred_check
        %p1131 = pneg %p240
      $region66: #{sequential_model_forward_t.1} parent=63 // pred_check_branch
        %1133 = sbr.rel (%p1131) target = $region68
      $region67: #{sequential_model_forward_t.1} parent=63 // pred_region
        %s1134 = smul.u32 4, %s23
        %p1135 = scmp.lt.s32.totalorder %s1134, 15
        %s1136 = scalar_select %p1135, %s1134, 15
        %s1137 = scalar_lea.vmem %s9, %s1136
      $region68: #{sequential_model_forward_t.1} parent=63 // pred_fallthru
        _
    $region64: #{sequential_model_forward_t.1} parent=5 // pred_fallthru
      _
  $region6: #{sequential_model_forward_t.1} parent=0 // loop_footer
    %s21 = sadd.s32 1, %s17
  $region7: #{sequential_model_forward_t.1} parent=0 // loop_footer_branch
    %16 = sbr.rel target = $region3
  $region8: #{sequential_model_forward_t.1} parent=0 // loop_exit
    _

</llo_original>
